<compile_context>
chip_gen: v7x
topology: tpu7x:2x2x1
jax: 0.10.0
libtpu: 0.0.40
codegen_flags: <defaults>
</compile_context>

<pallas_src>
import functools

import jax
import jax.numpy as jnp
from jax.experimental import pallas as pl
from jax.experimental.pallas import tpu as pltpu

_LANE = 128
_SUBLANE = 8
_DEFAULT_TILE_B = 1024        # fat tiles amortize ~0.35us/step pipeline overhead
_SPLIT_BATCH_THRESHOLD = 512  # above this, force >=2 grid steps (v7x 2-TC sharding)


def _round_up(x, m):
    return (x + m - 1) // m * m


def _vmem_capacity_bytes():
    try:
        return int(pltpu.get_tpu_info().vmem_capacity_bytes)
    except Exception:
        return 64 << 20  # conservative fallback (v7x per-TC VMEM)


def _select_tile_b(batch, tile_b):
    if tile_b is None:
        tile_b = _DEFAULT_TILE_B
    tile_b = min(tile_b, batch)
    if tile_b < batch:
        tile_b = max(_SUBLANE, _round_up(tile_b, _SUBLANE))
        if tile_b >= batch:
            return batch
    # Ensure >= 2 grid steps on large batches so dimension_semantics=("parallel",)
    # can shard across both v7x TensorCores (harmless extra step on v5e/v6e).
    if batch >= _SPLIT_BATCH_THRESHOLD and pl.cdiv(batch, tile_b) < 2:
        tile_b = min(batch, max(_SUBLANE, _round_up(pl.cdiv(batch, 2), _SUBLANE)))
    return tile_b


def prepare_param_net(params, *, weights_dtype=None):
    """One-time parameter prep (hoisted out of the per-step forward).

    params: list of (W, b) with W shape (in, out), b shape (out,) or (1, out).
    Hidden feature dims are zero-padded to multiples of 128 (lane-dense intra-
    kernel activations / MXU tiles).  The first layer's K (n_state) and the
    last layer's N (action_parameter_size) are left UN-padded so the HBM-facing
    input/output arrays carry no wasted bytes.  Biases are fused into a single
    (n_layers, max_width) f32 array.  weights_dtype=jnp.bfloat16 halves the
    resident-weight VMEM / DMA on v6e/v7x (f32 accumulation in the kernel).
    """
    n_layers = len(params)
    n_state = int(params[0][0].shape[0])
    out_dim = int(params[-1][0].shape[1])

    ws, bs = [], []
    for i, (w, b) in enumerate(params):
        din, dout = int(w.shape[0]), int(w.shape[1])
        din_p = din if i == 0 else _round_up(din, _LANE)              # layer-0 K un-padded
        dout_p = dout if i == n_layers - 1 else _round_up(dout, _LANE)  # last-layer N un-padded
        wp = jnp.zeros((din_p, dout_p), jnp.float32).at[:din, :dout].set(
            jnp.asarray(w, jnp.float32))
        if weights_dtype is not None:
            wp = wp.astype(weights_dtype)
        bp = jnp.zeros((dout_p,), jnp.float32).at[:dout].set(
            jnp.asarray(b, jnp.float32).reshape(-1))
        ws.append(wp)
        bs.append(bp)

    max_w = max(int(b.shape[0]) for b in bs)
    biases = jnp.zeros((n_layers, max_w), jnp.float32)
    for i, b in enumerate(bs):
        biases = biases.at[i, : b.shape[0]].set(b)

    return {
        "ws": tuple(ws),
        "biases": biases,
        "n_state": n_state,
        "out_dim": out_dim,
        "n_layers": n_layers,
        "logical_sizes": tuple((int(w.shape[0]), int(w.shape[1])) for w, _ in params),
    }


def _mlp_kernel(n_layers, x_ref, *refs):
    """Fused MLP over one (tile_b, n_state) activation slab.

    refs = (w_0, ..., w_{n_layers-1}, biases, out).  Weights/biases use
    constant index_maps so they are DMA'd once and stay VMEM-resident across
    all batch tiles.  ReLU after every layer except the last (ParamNet.forward).
    """
    w_refs = refs[:n_layers]
    b_ref = refs[n_layers]
    out_ref = refs[n_layers + 1]

    x = x_ref[...]
    if x.dtype != jnp.float32:
        x = x.astype(jnp.float32)
    for i in range(n_layers):
        w = w_refs[i][...]
        if x.dtype != w.dtype:                     # bf16 weights -> bf16 x bf16 MXU
            x = x.astype(w.dtype)
        dout = w.shape[1]
        y = jnp.dot(x, w, preferred_element_type=jnp.float32)   # f32 accumulation
        y = y + b_ref[i:i + 1, :dout]              # f32 bias (VPU epilogue)
        if i < n_layers - 1:
            y = jnp.maximum(y, 0.0)                # ReLU on hidden layers only
        x = y
    out_ref[...] = x.astype(out_ref.dtype)


def param_net_forward(state, prepared, *, tile_b=None):
    """ParamNet forward via a single batch-tiled pallas_call.

    state:    (batch, n_state) float array (cast to f32 in-kernel, per-tile)
    prepared: output of prepare_param_net
    returns   (batch, action_parameter_size) float32
    """
    ws = prepared["ws"]
    biases = prepared["biases"]
    n_layers = prepared["n_layers"]
    out_dim = prepared["out_dim"]
    batch, n_state = state.shape
    assert n_state == prepared["n_state"], "state feature dim mismatch"

    tile_b = _select_tile_b(batch, tile_b)
    grid = (pl.cdiv(batch, tile_b),)  # partial last tile OK: rows independent

    # Activations tiled over batch; weights/biases resident (constant index_map).
    in_specs = [pl.BlockSpec((tile_b, n_state), lambda i: (i, 0))]
    for w in ws:
        in_specs.append(pl.BlockSpec(w.shape, lambda i: (0, 0)))
    in_specs.append(pl.BlockSpec(biases.shape, lambda i: (0, 0)))
    out_specs = pl.BlockSpec((tile_b, out_dim), lambda i: (i, 0))

    # Advisory cost estimate on logical (un-padded) shapes.
    flops = 2 * batch * sum(din * dout for din, dout in prepared["logical_sizes"])
    wb_bytes = (sum(w.size * w.dtype.itemsize for w in ws)
                + biases.size * biases.dtype.itemsize)
    bytes_accessed = (state.size * state.dtype.itemsize
                      + wb_bytes + batch * out_dim * 4)
    cost = pl.CostEstimate(flops=flops, transcendentals=0,
                           bytes_accessed=bytes_accessed)

    # VMEM budget: double-buffered in/out tiles + resident params (x2 for the
    # pipeline's buffering) + staged per-layer intermediates (activations do
    # NOT all stay in vregs once tile_b >= 256).  Cap generation-aware at ~85%
    # of physical VMEM so Mosaic keeps internal scratch/semaphore headroom.
    max_width = max(w.shape[1] for w in ws)
    tile_io_bytes = tile_b * (n_state * state.dtype.itemsize + out_dim * 4)
    interm_bytes = 2 * n_layers * tile_b * max_width * 4
    vmem_needed = 2 * tile_io_bytes + 2 * wb_bytes + interm_bytes
    phys = _vmem_capacity_bytes()
    vmem_limit = int(min(max(vmem_needed + (8 << 20), 32 << 20), int(phys * 0.85)))
    # TODO(synk): if resident weights alone ever exceed the VMEM cap, switch the
    # weight BlockSpecs to K/N-tiled index_maps instead of whole-array residency.

    kernel = functools.partial(_mlp_kernel, n_layers)
    return pl.pallas_call(
        kernel,
        out_shape=jax.ShapeDtypeStruct((batch, out_dim), jnp.float32),
        grid_spec=pltpu.PrefetchScalarGridSpec(
            num_scalar_prefetch=0,
            grid=grid,
            in_specs=in_specs,
            out_specs=out_specs,
        ),
        compiler_params=pltpu.CompilerParams(
            dimension_semantics=("parallel",),   # shards batch tiles across v7x TCs
            vmem_limit_bytes=vmem_limit,
        ),
        cost_estimate=cost,
    )(state, *ws, biases)


def init_param_net(key, n_state, action_parameter_size, hidden_layers):
    """Deterministic init mimicking PyTorch nn.Linear defaults:
    W, b ~ U(-1/sqrt(fan_in), 1/sqrt(fan_in)); W stored as (in, out)."""
    sizes = [n_state] + list(hidden_layers or []) + [action_parameter_size]
    params = []
    for i in range(len(sizes) - 1):
        fan_in, fan_out = sizes[i], sizes[i + 1]
        key, kw, kb = jax.random.split(key, 3)
        bound = 1.0 / jnp.sqrt(jnp.float32(fan_in))
        w = jax.random.uniform(kw, (fan_in, fan_out), jnp.float32, -bound, bound)
        b = jax.random.uniform(kb, (fan_out,), jnp.float32, -bound, bound)
        params.append((w, b))
    return params


def param_net_reference(state, params):
    """Plain-JAX reference for correctness checking."""
    x = state.astype(jnp.float32)
    for i, (w, b) in enumerate(params):
        x = x @ w + b.reshape(1, -1)
        if i < len(params) - 1:
            x = jnp.maximum(x, 0.0)
    return x


if __name__ == "__main__":
    # Small deterministic config consistent with ParamNet's constructor.
    n_state = 32
    n_action = 4                       # unused by forward, kept for fidelity
    action_parameter_size = 16
    hidden_layers = [64, 64]
    batch = 8

    key = jax.random.PRNGKey(0)
    key, k_state = jax.random.split(key)
    state = jax.random.normal(k_state, (batch, n_state), jnp.float32)

    params = init_param_net(key, n_state, action_parameter_size, hidden_layers)
    prepared = prepare_param_net(params)                 # pad/fuse params ONCE

    # Tiny-batch path (single grid step, un-padded input/output widths).
    out = jax.block_until_ready(param_net_forward(state, prepared))
    ref = param_net_reference(state, params)
    assert out.shape == (batch, action_parameter_size)
    assert jnp.allclose(out, ref, atol=1e-5, rtol=1e-5), "mismatch vs reference"

    # Multi-tile batch grid with a partial last tile (300 = 2*128 + 44).
    key, k_big = jax.random.split(key)
    big_state = jax.random.normal(k_big, (300, n_state), jnp.float32)
    out_big = jax.block_until_ready(
        param_net_forward(big_state, prepared, tile_b=128))
    ref_big = param_net_reference(big_state, params)
    assert out_big.shape == (300, action_parameter_size)
    assert jnp.allclose(out_big, ref_big, atol=1e-4, rtol=1e-4), "grid mismatch"

    # bf16-weight path (v6e/v7x recommendation): f32 accumulation, loose tol.
    prepared_bf16 = prepare_param_net(params, weights_dtype=jnp.bfloat16)
    out_bf16 = jax.block_until_ready(
        param_net_forward(big_state, prepared_bf16, tile_b=128))
    assert jnp.allclose(out_bf16, ref_big, atol=5e-2, rtol=5e-2), "bf16 mismatch"

    print("KERNEL_OK")
</pallas_src>

<mosaic_0001>
module attributes {stable_mosaic.version = 11 : i64} {
  func.func @_mlp_kernel(%arg0: i32, %arg1: memref<8x32xf32, #tpu.memory_space<vmem>>, %arg2: memref<32x128xf32, #tpu.memory_space<vmem>>, %arg3: memref<128x128xf32, #tpu.memory_space<vmem>>, %arg4: memref<128x16xf32, #tpu.memory_space<vmem>>, %arg5: memref<3x128xf32, #tpu.memory_space<vmem>>, %arg6: memref<8x16xf32, #tpu.memory_space<vmem>>) attributes {dimension_semantics = [#tpu.dimension_semantics<parallel>], iteration_bounds = array<i64: 1>, scalar_prefetch = 0 : i64, scratch_operands = 0 : i64, tpu.core_type = #tpu.core_type<tc>, window_params = [{transform_indices = @transform_0, window_bounds = array<i64: 8, 32>}, {pipeline_mode = #tpu.pipeline_mode<synchronous>, transform_indices = @transform_1, window_bounds = array<i64: 32, 128>}, {pipeline_mode = #tpu.pipeline_mode<synchronous>, transform_indices = @transform_2, window_bounds = array<i64: 128, 128>}, {pipeline_mode = #tpu.pipeline_mode<synchronous>, transform_indices = @transform_3, window_bounds = array<i64: 128, 16>}, {pipeline_mode = #tpu.pipeline_mode<synchronous>, transform_indices = @transform_4, window_bounds = array<i64: 3, 128>}, {transform_indices = @transform_5, window_bounds = array<i64: 8, 16>}]} {
    %c0 = arith.constant 0 : index
    %c0_0 = arith.constant 0 : index
    %0 = vector.load %arg1[%c0, %c0_0] : memref<8x32xf32, #tpu.memory_space<vmem>>, vector<8x32xf32>
    %c0_1 = arith.constant 0 : index
    %c0_2 = arith.constant 0 : index
    %1 = vector.load %arg2[%c0_1, %c0_2] : memref<32x128xf32, #tpu.memory_space<vmem>>, vector<32x128xf32>
    %cst = arith.constant dense<0.000000e+00> : vector<8x128xf32>
    %2 = tpu.matmul %0, %1, %cst {dimension_numbers = #tpu.dot_dimension_numbers<[1], [0], [0], [1], [0, 0, 1, 1], [], []>} : vector<8x32xf32>, vector<32x128xf32>, vector<8x128xf32> -> vector<8x128xf32>
    %c0_3 = arith.constant 0 : index
    %c0_4 = arith.constant 0 : index
    %3 = vector.load %arg5[%c0_3, %c0_4] : memref<3x128xf32, #tpu.memory_space<vmem>>, vector<1x128xf32>
    %4 = vector.broadcast %3 : vector<1x128xf32> to vector<8x128xf32>
    %5 = arith.addf %2, %4 : vector<8x128xf32>
    %cst_5 = arith.constant 0.000000e+00 : f32
    %6 = vector.broadcast %cst_5 : f32 to vector<8x128xf32>
    %7 = arith.maximumf %5, %6 : vector<8x128xf32>
    %c0_6 = arith.constant 0 : index
    %c0_7 = arith.constant 0 : index
    %8 = vector.load %arg3[%c0_6, %c0_7] : memref<128x128xf32, #tpu.memory_space<vmem>>, vector<128x128xf32>
    %cst_8 = arith.constant dense<0.000000e+00> : vector<8x128xf32>
    %9 = tpu.matmul %7, %8, %cst_8 {dimension_numbers = #tpu.dot_dimension_numbers<[1], [0], [0], [1], [0, 0, 1, 1], [], []>} : vector<8x128xf32>, vector<128x128xf32>, vector<8x128xf32> -> vector<8x128xf32>
    %c1 = arith.constant 1 : index
    %c0_9 = arith.constant 0 : index
    %10 = vector.load %arg5[%c1, %c0_9] : memref<3x128xf32, #tpu.memory_space<vmem>>, vector<1x128xf32>
    %11 = vector.broadcast %10 : vector<1x128xf32> to vector<8x128xf32>
    %12 = arith.addf %9, %11 : vector<8x128xf32>
    %cst_10 = arith.constant 0.000000e+00 : f32
    %13 = vector.broadcast %cst_10 : f32 to vector<8x128xf32>
    %14 = arith.maximumf %12, %13 : vector<8x128xf32>
    %c0_11 = arith.constant 0 : index
    %c0_12 = arith.constant 0 : index
    %15 = vector.load %arg4[%c0_11, %c0_12] : memref<128x16xf32, #tpu.memory_space<vmem>>, vector<128x16xf32>
    %cst_13 = arith.constant dense<0.000000e+00> : vector<8x16xf32>
    %16 = tpu.matmul %14, %15, %cst_13 {dimension_numbers = #tpu.dot_dimension_numbers<[1], [0], [0], [1], [0, 0, 1, 1], [], []>} : vector<8x128xf32>, vector<128x16xf32>, vector<8x16xf32> -> vector<8x16xf32>
    %c2 = arith.constant 2 : index
    %c0_14 = arith.constant 0 : index
    %17 = vector.load %arg5[%c2, %c0_14] : memref<3x128xf32, #tpu.memory_space<vmem>>, vector<1x16xf32>
    %18 = vector.broadcast %17 : vector<1x16xf32> to vector<8x16xf32>
    %19 = arith.addf %16, %18 : vector<8x16xf32>
    %c0_15 = arith.constant 0 : index
    %c0_16 = arith.constant 0 : index
    %20 = vector.load %arg6[%c0_15, %c0_16] : memref<8x16xf32, #tpu.memory_space<vmem>>, vector<8x16xf32>
    tpu.vector_store %arg6[%c0_15, %c0_16], %19 {strides = array<i32>} : memref<8x16xf32, #tpu.memory_space<vmem>>, vector<8x16xf32>,
    return
  }
  func.func @transform_0(%arg0: i32) -> (i32, i32) {
    %c0_i32 = arith.constant 0 : i32
    %c0_i32_0 = arith.constant 0 : i32
    return %arg0, %c0_i32 : i32, i32
  }
  func.func @transform_1(%arg0: i32) -> (i32, i32) {
    %c0_i32 = arith.constant 0 : i32
    %c0_i32_0 = arith.constant 0 : i32
    %c0_i32_1 = arith.constant 0 : i32
    return %c0_i32, %c0_i32_0 : i32, i32
  }
  func.func @transform_2(%arg0: i32) -> (i32, i32) {
    %c0_i32 = arith.constant 0 : i32
    %c0_i32_0 = arith.constant 0 : i32
    %c0_i32_1 = arith.constant 0 : i32
    return %c0_i32, %c0_i32_0 : i32, i32
  }
  func.func @transform_3(%arg0: i32) -> (i32, i32) {
    %c0_i32 = arith.constant 0 : i32
    %c0_i32_0 = arith.constant 0 : i32
    %c0_i32_1 = arith.constant 0 : i32
    return %c0_i32, %c0_i32_0 : i32, i32
  }
  func.func @transform_4(%arg0: i32) -> (i32, i32) {
    %c0_i32 = arith.constant 0 : i32
    %c0_i32_0 = arith.constant 0 : i32
    %c0_i32_1 = arith.constant 0 : i32
    return %c0_i32, %c0_i32_0 : i32, i32
  }
  func.func @transform_5(%arg0: i32) -> (i32, i32) {
    %c0_i32 = arith.constant 0 : i32
    %c0_i32_0 = arith.constant 0 : i32
    return %arg0, %c0_i32 : i32, i32
  }
}

</mosaic_0001>

<llo_original>
// kernel: tpu_custom_call.1
$region0: #{tpu_custom_call.1}
  #allocation0 [shape = 'u32[]', space=smem, size = 0x4, offset = 0x4, fixed_abs, tag = 'smem constant byte address 0x4 - core index']
  #allocation1 [shape = 'u32[144,128]{1,0:T(1,128)}', space=vmem, size = 0x12000, scoped, tag = 'internal scratch']
  %s0 = inlined_call_operand.vmem [shape: f32[8,32], index: 0, kind: input, shape index: {}]
  %s1 = inlined_call_operand.hbm [shape: f32[32,128], index: 1, kind: input, shape index: {}]
  %s2 = inlined_call_operand.vmem [shape: f32[128,128], index: 2, kind: input, shape index: {}]
  %s3 = inlined_call_operand.vmem [shape: f32[128,16], index: 3, kind: input, shape index: {}]
  %s4 = inlined_call_operand.vmem [shape: f32[3,128], index: 4, kind: input, shape index: {}]
  %s5 = inlined_call_operand.hbm [shape: f32[8,16], index: 5, kind: output, shape index: {}]
  %s6 = sld [smem:[#allocation0]]
  $region34: #{tpu_custom_call.1} parent=0
    _
  %s8 = ssub.s32 1, %s6
  %s9 = scalar_select 0, %s8, %s6
  $region1: #{tpu_custom_call.1} parent=0
    #allocation2 [shape = 'u8[16384]{0}', space=vmem, size = 0x4000, scoped, tag = 'input window, operand 1, single buffered']
    #allocation3 [shape = 's32[1]{0}', space=sflag, size = 0x4, scoped, tag = 'scoped memory for tpu_custom_call.1']
    #allocation4 [shape = 's32[1]{0}', space=sflag, size = 0x4, scoped, tag = 'scoped memory for tpu_custom_call.1']
    #allocation5 [shape = 'u8[4096]{0}', space=vmem, size = 0x1000, scoped, tag = 'output window, operand 0, single buffered']
    %10 = vsyncpa [#allocation3], 0
    %11 = vsyncpa [#allocation4], 0
    // Predicated region
    $region2: #{tpu_custom_call.1} parent=1 // pred_check
      _
    $region3: #{tpu_custom_call.1} parent=1 // pred_check_branch
      %13 = sbr.rel (0) target = $region5
    $region4: #{tpu_custom_call.1} parent=1 // pred_region
      _
    $region5: #{tpu_custom_call.1} parent=1 // pred_fallthru
      _
    // Predicated region
    $region6: #{tpu_custom_call.1} parent=1 // pred_check
      _
    $region7: #{tpu_custom_call.1} parent=1 // pred_check_branch
      %15 = sbr.rel (0) target = $region9
    $region8: #{tpu_custom_call.1} parent=1 // pred_region
      %s17 = ssub.s32 512, 512
      %18 = vsyncadd [#allocation3], %s17
      %s19 = sshll.u32 [#allocation2], 4
      %s20 = int_to_ptr.vmem [resolvable:$true] %s19
      %25 = dma.hbm_to_vmem [thread:$0]  %s1, 512, %s20, [#allocation3], 128, 128, 8
    $region9: #{tpu_custom_call.1} parent=1 // pred_fallthru
      _
    // Predicated region
    $region10: #{tpu_custom_call.1} parent=1 // pred_check
      _
    $region11: #{tpu_custom_call.1} parent=1 // pred_check_branch
      %27 = sbr.rel (0) target = $region13
    $region12: #{tpu_custom_call.1} parent=1 // pred_region
      _
    $region13: #{tpu_custom_call.1} parent=1 // pred_fallthru
      _
    // Predicated region
    $region14: #{tpu_custom_call.1} parent=1 // pred_check
      _
    $region15: #{tpu_custom_call.1} parent=1 // pred_check_branch
      %29 = sbr.rel (0) target = $region17
    $region16: #{tpu_custom_call.1} parent=1 // pred_region
      _
    $region17: #{tpu_custom_call.1} parent=1 // pred_fallthru
      _
    // Predicated region
    $region18: #{tpu_custom_call.1} parent=1 // pred_check
      _
    $region19: #{tpu_custom_call.1} parent=1 // pred_check_branch
      %31 = sbr.rel (0) target = $region21
    $region20: #{tpu_custom_call.1} parent=1 // pred_region
      _
    $region21: #{tpu_custom_call.1} parent=1 // pred_fallthru
      _
    // Predicated region
    $region22: #{tpu_custom_call.1} parent=1 // pred_check
      _
    $region23: #{tpu_custom_call.1} parent=1 // pred_check_branch
      %33 = sbr.rel (0) target = $region25
    $region24: #{tpu_custom_call.1} parent=1 // pred_region
      %34 = dma.done [#allocation3], 512
    $region25: #{tpu_custom_call.1} parent=1 // pred_fallthru
      _
    %v35 = vld [vmem:[%s0] sm:$0xff]
    %v36 = vld [vmem:[#allocation2] sm:$0xff]
    %v37 = vld [vmem:[#allocation2 + $0x8] sm:$0xff]
    %v38 = vld [vmem:[#allocation2 + $0x10] sm:$0xff]
    %v39 = vld [vmem:[#allocation2 + $0x18] sm:$0xff]
    %v40 = vld [vmem:[%s4] sm:$0x1]
    %v41 = vlaneseq
    %v42 = vshrl.u32 %v41, 7
    %v43 = vsub.s32 0, %v42
    %v44 = vrot.slane %v40, %v43
    %vm45 = vcmask 261120
    %v47 = vsel %vm45, %v35, 0
    %49 = vmatprep.subr.mxu0 0.0
    %50 = vmatpush1.msra.mxu0 %v36
    %51 = vmatprep.subr.mxu0 0.0
    %52 = vmatpush1.msra.mxu0 %v37
    %53 = vmatprep.subr.mxu0 0.0
    %54 = vmatpush1.msra.mxu0 %v38
    %55 = vmatprep.subr.mxu0 0.0
    %56 = vmatpush1.msra.mxu0 %v39
    %57 = vmatprep.subr.mxu0 0.0
    %58 = vmatpush1.msra.mxu0 0.0
    %59 = vmatprep.subr.mxu0 0.0
    %60 = vmatpush1.msra.mxu0 0.0
    %61 = vmatprep.subr.mxu0 0.0
    %62 = vmatpush1.msra.mxu0 0.0
    %63 = vmatprep.subr.mxu0 0.0
    %64 = vmatpush1.msra.mxu0 0.0
    %65 = vmatprep.subr.mxu0 0.0
    %66 = vmatpush1.msra.mxu0 0.0
    %67 = vmatprep.subr.mxu0 0.0
    %68 = vmatpush1.msra.mxu0 0.0
    %69 = vmatprep.subr.mxu0 0.0
    %70 = vmatpush1.msra.mxu0 0.0
    %71 = vmatprep.subr.mxu0 0.0
    %72 = vmatpush1.msra.mxu0 0.0
    %73 = vmatprep.subr.mxu0 0.0
    %74 = vmatpush1.msra.mxu0 0.0
    %75 = vmatprep.subr.mxu0 0.0
    %76 = vmatpush1.msra.mxu0 0.0
    %77 = vmatprep.subr.mxu0 0.0
    %78 = vmatpush1.msra.mxu0 0.0
    %79 = vmatprep.subr.mxu0 0.0
    %80 = vmatpush1.msra.mxu0 0.0
    %81 = vmatprep.subr.mxu0 0.0
    %82 = vmatpush1.msra.mxu0 0.0
    %83 = vmatprep.subr.mxu0 0.0
    %84 = vmatpush1.msra.mxu0 0.0
    %85 = vmatprep.subr.mxu0 0.0
    %86 = vmatpush1.msra.mxu0 0.0
    %87 = vmatprep.subr.mxu0 0.0
    %88 = vmatpush1.msra.mxu0 0.0
    %89 = vmatprep.subr.mxu0 0.0
    %90 = vmatpush1.msra.mxu0 0.0
    %91 = vmatprep.subr.mxu0 0.0
    %92 = vmatpush1.msra.mxu0 0.0
    %93 = vmatprep.subr.mxu0 0.0
    %94 = vmatpush1.msra.mxu0 0.0
    %95 = vmatprep.subr.mxu0 0.0
    %96 = vmatpush1.msra.mxu0 0.0
    %97 = vmatprep.subr.mxu0 0.0
    %98 = vmatpush1.msra.mxu0 0.0
    %99 = vmatprep.subr.mxu0 0.0
    %100 = vmatpush1.msra.mxu0 0.0
    %101 = vmatprep.subr.mxu0 0.0
    %102 = vmatpush1.msra.mxu0 0.0
    %103 = vmatprep.subr.mxu0 0.0
    %104 = vmatpush1.msra.mxu0 0.0
    %105 = vmatprep.subr.mxu0 0.0
    %106 = vmatpush1.msra.mxu0 0.0
    %107 = vmatprep.subr.mxu0 0.0
    %108 = vmatpush1.msra.mxu0 0.0
    %109 = vmatprep.subr.mxu0 0.0
    %110 = vmatpush1.msra.mxu0 0.0
    %111 = vmatprep.subr.mxu0 0.0
    %112 = vmatpush1.msra.mxu0 0.0
    %113 = vmatprep.mubr.f32.mxu0 0.0
    %114 = vmatmul.mubr.f32.gmra.mrb[0].mxu0 %v47
    %v115 = vpop.f32.mrb[0].mxu0
    %v116 = vadd.f32 %v44, %v115
    %v117 = vpop.f32.mrb[0].mxu0
    %118 = vdwg.mxu0
    %v119 = vmax.f32 %v116, 0.0
    %v120 = vld [vmem:[%s2] sm:$0xff]
    %v121 = vld [vmem:[%s2 + $0x8] sm:$0xff]
    %v122 = vld [vmem:[%s2 + $0x10] sm:$0xff]
    %v123 = vld [vmem:[%s2 + $0x18] sm:$0xff]
    %v124 = vld [vmem:[%s2 + $0x20] sm:$0xff]
    %v125 = vld [vmem:[%s2 + $0x28] sm:$0xff]
    %v126 = vld [vmem:[%s2 + $0x30] sm:$0xff]
    %v127 = vld [vmem:[%s2 + $0x38] sm:$0xff]
    %v128 = vld [vmem:[%s2 + $0x40] sm:$0xff]
    %v129 = vld [vmem:[%s2 + $0x48] sm:$0xff]
    %v130 = vld [vmem:[%s2 + $0x50] sm:$0xff]
    %v131 = vld [vmem:[%s2 + $0x58] sm:$0xff]
    %v132 = vld [vmem:[%s2 + $0x60] sm:$0xff]
    %v133 = vld [vmem:[%s2 + $0x68] sm:$0xff]
    %v134 = vld [vmem:[%s2 + $0x70] sm:$0xff]
    %v135 = vld [vmem:[%s2 + $0x78] sm:$0xff]
    %v136 = vld [vmem:[%s4 + $0x1] sm:$0x1]
    %v137 = vlaneseq
    %v138 = vshrl.u32 %v137, 7
    %v139 = vsub.s32 0, %v138
    %v140 = vrot.slane %v136, %v139
    %141 = vmatprep.subr.mxu0 0.0
    %142 = vmatpush1.msra.mxu0 %v120
    %143 = vmatprep.subr.mxu0 0.0
    %144 = vmatpush1.msra.mxu0 %v121
    %145 = vmatprep.subr.mxu0 0.0
    %146 = vmatpush1.msra.mxu0 %v122
    %147 = vmatprep.subr.mxu0 0.0
    %148 = vmatpush1.msra.mxu0 %v123
    %149 = vmatprep.subr.mxu0 0.0
    %150 = vmatpush1.msra.mxu0 %v124
    %151 = vmatprep.subr.mxu0 0.0
    %152 = vmatpush1.msra.mxu0 %v125
    %153 = vmatprep.subr.mxu0 0.0
    %154 = vmatpush1.msra.mxu0 %v126
    %155 = vmatprep.subr.mxu0 0.0
    %156 = vmatpush1.msra.mxu0 %v127
    %157 = vmatprep.subr.mxu0 0.0
    %158 = vmatpush1.msra.mxu0 %v128
    %159 = vmatprep.subr.mxu0 0.0
    %160 = vmatpush1.msra.mxu0 %v129
    %161 = vmatprep.subr.mxu0 0.0
    %162 = vmatpush1.msra.mxu0 %v130
    %163 = vmatprep.subr.mxu0 0.0
    %164 = vmatpush1.msra.mxu0 %v131
    %165 = vmatprep.subr.mxu0 0.0
    %166 = vmatpush1.msra.mxu0 %v132
    %167 = vmatprep.subr.mxu0 0.0
    %168 = vmatpush1.msra.mxu0 %v133
    %169 = vmatprep.subr.mxu0 0.0
    %170 = vmatpush1.msra.mxu0 %v134
    %171 = vmatprep.subr.mxu0 0.0
    %172 = vmatpush1.msra.mxu0 %v135
    %173 = vmatprep.subr.mxu0 0.0
    %174 = vmatpush1.msra.mxu0 0.0
    %175 = vmatprep.subr.mxu0 0.0
    %176 = vmatpush1.msra.mxu0 0.0
    %177 = vmatprep.subr.mxu0 0.0
    %178 = vmatpush1.msra.mxu0 0.0
    %179 = vmatprep.subr.mxu0 0.0
    %180 = vmatpush1.msra.mxu0 0.0
    %181 = vmatprep.subr.mxu0 0.0
    %182 = vmatpush1.msra.mxu0 0.0
    %183 = vmatprep.subr.mxu0 0.0
    %184 = vmatpush1.msra.mxu0 0.0
    %185 = vmatprep.subr.mxu0 0.0
    %186 = vmatpush1.msra.mxu0 0.0
    %187 = vmatprep.subr.mxu0 0.0
    %188 = vmatpush1.msra.mxu0 0.0
    %189 = vmatprep.subr.mxu0 0.0
    %190 = vmatpush1.msra.mxu0 0.0
    %191 = vmatprep.subr.mxu0 0.0
    %192 = vmatpush1.msra.mxu0 0.0
    %193 = vmatprep.subr.mxu0 0.0
    %194 = vmatpush1.msra.mxu0 0.0
    %195 = vmatprep.subr.mxu0 0.0
    %196 = vmatpush1.msra.mxu0 0.0
    %197 = vmatprep.subr.mxu0 0.0
    %198 = vmatpush1.msra.mxu0 0.0
    %199 = vmatprep.subr.mxu0 0.0
    %200 = vmatpush1.msra.mxu0 0.0
    %201 = vmatprep.subr.mxu0 0.0
    %202 = vmatpush1.msra.mxu0 0.0
    %203 = vmatprep.subr.mxu0 0.0
    %204 = vmatpush1.msra.mxu0 0.0
    %205 = vmatprep.mubr.f32.mxu0 0.0
    %206 = vmatmul.mubr.f32.gmra.mrb[0].mxu0 %v119
    %v207 = vpop.f32.mrb[0].mxu0
    %v208 = vadd.f32 %v140, %v207
    %v209 = vpop.f32.mrb[0].mxu0
    %210 = vdwg.mxu0
    %v211 = vmax.f32 %v208, 0.0
    %v212 = vld [vmem:[%s3] sm:$0xff]
    %v213 = vld [vmem:[%s3 + $0x8] sm:$0xff]
    %v214 = vld [vmem:[%s3 + $0x10] sm:$0xff]
    %v215 = vld [vmem:[%s3 + $0x18] sm:$0xff]
    %v216 = vld [vmem:[%s3 + $0x20] sm:$0xff]
    %v217 = vld [vmem:[%s3 + $0x28] sm:$0xff]
    %v218 = vld [vmem:[%s3 + $0x30] sm:$0xff]
    %v219 = vld [vmem:[%s3 + $0x38] sm:$0xff]
    %v220 = vld [vmem:[%s3 + $0x40] sm:$0xff]
    %v221 = vld [vmem:[%s3 + $0x48] sm:$0xff]
    %v222 = vld [vmem:[%s3 + $0x50] sm:$0xff]
    %v223 = vld [vmem:[%s3 + $0x58] sm:$0xff]
    %v224 = vld [vmem:[%s3 + $0x60] sm:$0xff]
    %v225 = vld [vmem:[%s3 + $0x68] sm:$0xff]
    %v226 = vld [vmem:[%s3 + $0x70] sm:$0xff]
    %v227 = vld [vmem:[%s3 + $0x78] sm:$0xff]
    %v228 = vld [vmem:[%s4 + $0x2] sm:$0x1]
    %v229 = vlaneseq
    %v230 = vshrl.u32 %v229, 7
    %v231 = vsub.s32 0, %v230
    %v232 = vrot.slane %v228, %v231
    %233 = vmatprep.subr.mxu0 0.0
    %234 = vmatpush1.msra.mxu0 %v212
    %235 = vmatprep.subr.mxu0 0.0
    %236 = vmatpush1.msra.mxu0 %v213
    %237 = vmatprep.subr.mxu0 0.0
    %238 = vmatpush1.msra.mxu0 %v214
    %239 = vmatprep.subr.mxu0 0.0
    %240 = vmatpush1.msra.mxu0 %v215
    %241 = vmatprep.subr.mxu0 0.0
    %242 = vmatpush1.msra.mxu0 %v216
    %243 = vmatprep.subr.mxu0 0.0
    %244 = vmatpush1.msra.mxu0 %v217
    %245 = vmatprep.subr.mxu0 0.0
    %246 = vmatpush1.msra.mxu0 %v218
    %247 = vmatprep.subr.mxu0 0.0
    %248 = vmatpush1.msra.mxu0 %v219
    %249 = vmatprep.subr.mxu0 0.0
    %250 = vmatpush1.msra.mxu0 %v220
    %251 = vmatprep.subr.mxu0 0.0
    %252 = vmatpush1.msra.mxu0 %v221
    %253 = vmatprep.subr.mxu0 0.0
    %254 = vmatpush1.msra.mxu0 %v222
    %255 = vmatprep.subr.mxu0 0.0
    %256 = vmatpush1.msra.mxu0 %v223
    %257 = vmatprep.subr.mxu0 0.0
    %258 = vmatpush1.msra.mxu0 %v224
    %259 = vmatprep.subr.mxu0 0.0
    %260 = vmatpush1.msra.mxu0 %v225
    %261 = vmatprep.subr.mxu0 0.0
    %262 = vmatpush1.msra.mxu0 %v226
    %263 = vmatprep.subr.mxu0 0.0
    %264 = vmatpush1.msra.mxu0 %v227
    %265 = vmatprep.subr.mxu0 0.0
    %266 = vmatpush1.msra.mxu0 0.0
    %267 = vmatprep.subr.mxu0 0.0
    %268 = vmatpush1.msra.mxu0 0.0
    %269 = vmatprep.subr.mxu0 0.0
    %270 = vmatpush1.msra.mxu0 0.0
    %271 = vmatprep.subr.mxu0 0.0
    %272 = vmatpush1.msra.mxu0 0.0
    %273 = vmatprep.subr.mxu0 0.0
    %274 = vmatpush1.msra.mxu0 0.0
    %275 = vmatprep.subr.mxu0 0.0
    %276 = vmatpush1.msra.mxu0 0.0
    %277 = vmatprep.subr.mxu0 0.0
    %278 = vmatpush1.msra.mxu0 0.0
    %279 = vmatprep.subr.mxu0 0.0
    %280 = vmatpush1.msra.mxu0 0.0
    %281 = vmatprep.subr.mxu0 0.0
    %282 = vmatpush1.msra.mxu0 0.0
    %283 = vmatprep.subr.mxu0 0.0
    %284 = vmatpush1.msra.mxu0 0.0
    %285 = vmatprep.subr.mxu0 0.0
    %286 = vmatpush1.msra.mxu0 0.0
    %287 = vmatprep.subr.mxu0 0.0
    %288 = vmatpush1.msra.mxu0 0.0
    %289 = vmatprep.subr.mxu0 0.0
    %290 = vmatpush1.msra.mxu0 0.0
    %291 = vmatprep.subr.mxu0 0.0
    %292 = vmatpush1.msra.mxu0 0.0
    %293 = vmatprep.subr.mxu0 0.0
    %294 = vmatpush1.msra.mxu0 0.0
    %295 = vmatprep.subr.mxu0 0.0
    %296 = vmatpush1.msra.mxu0 0.0
    %297 = vmatprep.mubr.f32.mxu0 0.0
    %298 = vmatmul.mubr.f32.gmra.mrb[0].mxu0 %v211
    %v299 = vpop.f32.mrb[0].mxu0
    %v300 = vadd.f32 %v232, %v299
    %v301 = vpop.f32.mrb[0].mxu0
    %302 = vdwg.mxu0
    %vm303 = vcmask 130048
    %304 = vst.msk [vmem:[#allocation5] sm:$0xff] %vm303, %v300
    // Predicated region
    $region26: #{tpu_custom_call.1} parent=1 // pred_check
      _
    $region27: #{tpu_custom_call.1} parent=1 // pred_check_branch
      %306 = sbr.rel (0) target = $region29
    $region28: #{tpu_custom_call.1} parent=1 // pred_region
      %s308 = ssub.s32 128, 128
      %309 = vsyncadd [#allocation4], %s308
      %s311 = sshll.u32 [#allocation5], 4
      %s312 = int_to_ptr.vmem [resolvable:$true] %s311
      %314 = dma.vmem_to_hbm [thread:$0]  %s312, 128, %s5, [#allocation4]
    $region29: #{tpu_custom_call.1} parent=1 // pred_fallthru
      _
    // Predicated region
    $region30: #{tpu_custom_call.1} parent=1 // pred_check
      _
    $region31: #{tpu_custom_call.1} parent=1 // pred_check_branch
      %316 = sbr.rel (0) target = $region33
    $region32: #{tpu_custom_call.1} parent=1 // pred_region
      %317 = dma.done [#allocation4], 128
    $region33: #{tpu_custom_call.1} parent=1 // pred_fallthru
      _
    %318 = vsyncpa [#allocation3], 1
    %319 = vsyncpa [#allocation4], 1

</llo_original>
